<compile_context>
chip_gen: v7x
topology: tpu7x:2x2x1
jax: 0.10.0
libtpu: 0.0.40
codegen_flags: <defaults>
</compile_context>

<pallas_src>
import functools

import jax
import jax.numpy as jnp
from jax import lax
from jax.experimental import pallas as pl
from jax.experimental.pallas import tpu as pltpu


def gaussian_lowpass_window(sigma, filter_size):
    """Per-channel Gaussian windows, matching gaussian_lowpass() in the module.

    sigma : (C,) per-channel std parameter
    returns (C, filter_size) float32 window
    """
    sigma = jnp.clip(sigma.astype(jnp.float32), 2.0 / filter_size, 0.5)   # (C,)
    t = jnp.arange(filter_size, dtype=jnp.float32)                        # (K,)
    numerator = t[None, :] - 0.5 * (filter_size - 1)                      # (1, K)
    denominator = sigma[:, None] * 0.5 * (filter_size - 1)                # (C, 1)
    return jnp.exp(-0.5 * (numerator / denominator) ** 2)                 # (C, K)


def _gaussian_lowpass_kernel(w_ref, x_ref, o_ref, *, kernel_size: int,
                             seq_len: int):
    """One grid step = one batch element (fully vectorized over (C, S)).

    w_ref : (C, K)         per-channel Gaussian window (VMEM)
    x_ref : (C, S + K - 1) zero-padded input tile, time on lanes (VMEM)
    o_ref : (C, S)         output tile
    """
    x = x_ref[...]                                   # (C, S + K - 1)
    w = w_ref[...]                                   # (C, K)

    # Unrolled depthwise conv: K shifted multiply-adds on full (C, S) slabs.
    acc = w[:, 0:1] * x[:, 0:seq_len]
    for k in range(1, kernel_size):
        acc = acc + w[:, k:k + 1] * x[:, k:k + seq_len]

    o_ref[...] = acc                                 # single unmasked slab store


def gaussian_lowpass_forward(x_bcs, sigma, kernel_size, strides=1):
    """GaussianLowpass forward.

    x_bcs : [batch, channels, seq]  (PyTorch layout of the module's input)
    sigma : [channels] (or any shape reshapable to it) std parameter
    returns [batch, channels, seq]
    """
    if strides != 1:
        # TODO(synk): strided SAME depthwise conv not implemented.
        raise NotImplementedError("Only strides=1 (module default) supported.")

    B, C, S = x_bcs.shape
    K = int(kernel_size)
    pad_left = (K - 1) // 2
    pad_right = (K - 1) - pad_left
    Sp = S + K - 1

    # Hoisted parameter prep: clamp sigma + build the (C, K) Gaussian window.
    w = gaussian_lowpass_window(jnp.reshape(sigma, (-1,)), K)              # (C, K)

    # SAME zero-padding along time (done once outside the kernel).
    xp = jnp.pad(x_bcs.astype(jnp.float32),
                 ((0, 0), (0, 0), (pad_left, pad_right)))                  # (B, C, Sp)

    kernel = functools.partial(_gaussian_lowpass_kernel,
                               kernel_size=K, seq_len=S)

    out = pl.pallas_call(
        kernel,
        out_shape=jax.ShapeDtypeStruct((B, C, S), jnp.float32),
        grid_spec=pltpu.PrefetchScalarGridSpec(
            num_scalar_prefetch=0,
            grid=(B,),
            in_specs=[
                pl.BlockSpec((C, K), lambda b: (0, 0)),          # window (shared)
                pl.BlockSpec((None, C, Sp), lambda b: (b, 0, 0)),  # padded input
            ],
            out_specs=pl.BlockSpec((None, C, S), lambda b: (b, 0, 0)),
        ),
        compiler_params=pltpu.CompilerParams(
            dimension_semantics=("parallel",)),
    )(w, xp)

    return out


def gaussian_lowpass_reference(x_bcs, sigma, kernel_size):
    """Independent pure-JAX reference (depthwise conv) for validation."""
    C = x_bcs.shape[1]
    K = int(kernel_size)
    w = gaussian_lowpass_window(jnp.reshape(sigma, (-1,)), K)              # (C, K)
    rhs = w[:, None, :]                                                    # (C, 1, K)
    pad_left = (K - 1) // 2
    pad_right = (K - 1) - pad_left
    return lax.conv_general_dilated(
        x_bcs.astype(jnp.float32), rhs,
        window_strides=(1,),
        padding=[(pad_left, pad_right)],
        dimension_numbers=("NCH", "OIH", "NCH"),
        feature_group_count=C,
        precision=lax.Precision.HIGHEST)


if __name__ == "__main__":
    # Module defaults: filterbank_size=40, strides=1, padding='SAME'.
    # Small, TPU-friendly example: S a multiple of 128 for lane-dense stores.
    B, C, S = 2, 40, 256
    K = 9                                     # kernel_size

    key = jax.random.PRNGKey(0)
    k_sigma, k_x = jax.random.split(key)

    # Per-channel std parameter (analogous to the xavier-uniform init of the
    # (C,1,1,1) kernel parameter; the clamp in gaussian_lowpass handles the
    # out-of-range values).
    sigma = jax.random.uniform(k_sigma, (C,), jnp.float32,
                               minval=-0.4, maxval=0.5)
    x = jax.random.normal(k_x, (B, C, S), dtype=jnp.float32)

    out = gaussian_lowpass_forward(x, sigma, kernel_size=K, strides=1)
    out = jax.block_until_ready(out)

    ref = gaussian_lowpass_reference(x, sigma, kernel_size=K)
    assert out.shape == (B, C, S)
    assert jnp.allclose(out, ref, atol=1e-4, rtol=1e-4), "mismatch vs reference"

    print("KERNEL_OK")
</pallas_src>

<mosaic_0001>
module attributes {stable_mosaic.version = 11 : i64} {
  func.func @_gaussian_lowpass_kernel(%arg0: i32, %arg1: memref<40x9xf32, #tpu.memory_space<vmem>>, %arg2: memref<1x40x264xf32, #tpu.memory_space<vmem>>, %arg3: memref<1x40x256xf32, #tpu.memory_space<vmem>>) attributes {dimension_semantics = [#tpu.dimension_semantics<parallel>], iteration_bounds = array<i64: 2>, scalar_prefetch = 0 : i64, scratch_operands = 0 : i64, tpu.core_type = #tpu.core_type<tc>, window_params = [{pipeline_mode = #tpu.pipeline_mode<synchronous>, transform_indices = @transform_0, window_bounds = array<i64: 40, 9>}, {transform_indices = @transform_1, window_bounds = array<i64: 1, 40, 264>}, {transform_indices = @transform_2, window_bounds = array<i64: 1, 40, 256>}]} {
    %c0 = arith.constant 0 : index
    %c0_0 = arith.constant 0 : index
    %c0_1 = arith.constant 0 : index
    %0 = vector.load %arg2[%c0, %c0_0, %c0_1] : memref<1x40x264xf32, #tpu.memory_space<vmem>>, vector<1x40x264xf32>
    %1 = vector.shape_cast %0 : vector<1x40x264xf32> to vector<40x264xf32>
    %c0_2 = arith.constant 0 : index
    %c0_3 = arith.constant 0 : index
    %2 = vector.load %arg1[%c0_2, %c0_3] : memref<40x9xf32, #tpu.memory_space<vmem>>, vector<40x9xf32>
    %3 = vector.extract_strided_slice %2 {offsets = [0, 0], sizes = [40, 1], strides = [1, 1]} : vector<40x9xf32> to vector<40x1xf32>
    %4 = vector.extract_strided_slice %1 {offsets = [0, 0], sizes = [40, 256], strides = [1, 1]} : vector<40x264xf32> to vector<40x256xf32>
    %5 = vector.broadcast %3 : vector<40x1xf32> to vector<40x256xf32>
    %6 = arith.mulf %5, %4 : vector<40x256xf32>
    %7 = vector.extract_strided_slice %2 {offsets = [0, 1], sizes = [40, 1], strides = [1, 1]} : vector<40x9xf32> to vector<40x1xf32>
    %8 = vector.extract_strided_slice %1 {offsets = [0, 1], sizes = [40, 256], strides = [1, 1]} : vector<40x264xf32> to vector<40x256xf32>
    %9 = vector.broadcast %7 : vector<40x1xf32> to vector<40x256xf32>
    %10 = arith.mulf %9, %8 : vector<40x256xf32>
    %11 = arith.addf %6, %10 : vector<40x256xf32>
    %12 = vector.extract_strided_slice %2 {offsets = [0, 2], sizes = [40, 1], strides = [1, 1]} : vector<40x9xf32> to vector<40x1xf32>
    %13 = vector.extract_strided_slice %1 {offsets = [0, 2], sizes = [40, 256], strides = [1, 1]} : vector<40x264xf32> to vector<40x256xf32>
    %14 = vector.broadcast %12 : vector<40x1xf32> to vector<40x256xf32>
    %15 = arith.mulf %14, %13 : vector<40x256xf32>
    %16 = arith.addf %11, %15 : vector<40x256xf32>
    %17 = vector.extract_strided_slice %2 {offsets = [0, 3], sizes = [40, 1], strides = [1, 1]} : vector<40x9xf32> to vector<40x1xf32>
    %18 = vector.extract_strided_slice %1 {offsets = [0, 3], sizes = [40, 256], strides = [1, 1]} : vector<40x264xf32> to vector<40x256xf32>
    %19 = vector.broadcast %17 : vector<40x1xf32> to vector<40x256xf32>
    %20 = arith.mulf %19, %18 : vector<40x256xf32>
    %21 = arith.addf %16, %20 : vector<40x256xf32>
    %22 = vector.extract_strided_slice %2 {offsets = [0, 4], sizes = [40, 1], strides = [1, 1]} : vector<40x9xf32> to vector<40x1xf32>
    %23 = vector.extract_strided_slice %1 {offsets = [0, 4], sizes = [40, 256], strides = [1, 1]} : vector<40x264xf32> to vector<40x256xf32>
    %24 = vector.broadcast %22 : vector<40x1xf32> to vector<40x256xf32>
    %25 = arith.mulf %24, %23 : vector<40x256xf32>
    %26 = arith.addf %21, %25 : vector<40x256xf32>
    %27 = vector.extract_strided_slice %2 {offsets = [0, 5], sizes = [40, 1], strides = [1, 1]} : vector<40x9xf32> to vector<40x1xf32>
    %28 = vector.extract_strided_slice %1 {offsets = [0, 5], sizes = [40, 256], strides = [1, 1]} : vector<40x264xf32> to vector<40x256xf32>
    %29 = vector.broadcast %27 : vector<40x1xf32> to vector<40x256xf32>
    %30 = arith.mulf %29, %28 : vector<40x256xf32>
    %31 = arith.addf %26, %30 : vector<40x256xf32>
    %32 = vector.extract_strided_slice %2 {offsets = [0, 6], sizes = [40, 1], strides = [1, 1]} : vector<40x9xf32> to vector<40x1xf32>
    %33 = vector.extract_strided_slice %1 {offsets = [0, 6], sizes = [40, 256], strides = [1, 1]} : vector<40x264xf32> to vector<40x256xf32>
    %34 = vector.broadcast %32 : vector<40x1xf32> to vector<40x256xf32>
    %35 = arith.mulf %34, %33 : vector<40x256xf32>
    %36 = arith.addf %31, %35 : vector<40x256xf32>
    %37 = vector.extract_strided_slice %2 {offsets = [0, 7], sizes = [40, 1], strides = [1, 1]} : vector<40x9xf32> to vector<40x1xf32>
    %38 = vector.extract_strided_slice %1 {offsets = [0, 7], sizes = [40, 256], strides = [1, 1]} : vector<40x264xf32> to vector<40x256xf32>
    %39 = vector.broadcast %37 : vector<40x1xf32> to vector<40x256xf32>
    %40 = arith.mulf %39, %38 : vector<40x256xf32>
    %41 = arith.addf %36, %40 : vector<40x256xf32>
    %42 = vector.extract_strided_slice %2 {offsets = [0, 8], sizes = [40, 1], strides = [1, 1]} : vector<40x9xf32> to vector<40x1xf32>
    %43 = vector.extract_strided_slice %1 {offsets = [0, 8], sizes = [40, 256], strides = [1, 1]} : vector<40x264xf32> to vector<40x256xf32>
    %44 = vector.broadcast %42 : vector<40x1xf32> to vector<40x256xf32>
    %45 = arith.mulf %44, %43 : vector<40x256xf32>
    %46 = arith.addf %41, %45 : vector<40x256xf32>
    %c0_4 = arith.constant 0 : index
    %c0_5 = arith.constant 0 : index
    %c0_6 = arith.constant 0 : index
    %47 = vector.load %arg3[%c0_4, %c0_5, %c0_6] : memref<1x40x256xf32, #tpu.memory_space<vmem>>, vector<1x40x256xf32>
    %48 = vector.shape_cast %47 : vector<1x40x256xf32> to vector<40x256xf32>
    %49 = vector.shape_cast %46 : vector<40x256xf32> to vector<1x40x256xf32>
    tpu.vector_store %arg3[%c0_4, %c0_5, %c0_6], %49 {strides = array<i32>} : memref<1x40x256xf32, #tpu.memory_space<vmem>>, vector<1x40x256xf32>,
    return
  }
  func.func @transform_0(%arg0: i32) -> (i32, i32) {
    %c0_i32 = arith.constant 0 : i32
    %c0_i32_0 = arith.constant 0 : i32
    %c0_i32_1 = arith.constant 0 : i32
    return %c0_i32, %c0_i32_0 : i32, i32
  }
  func.func @transform_1(%arg0: i32) -> (i32, i32, i32) {
    %c0_i32 = arith.constant 0 : i32
    %c0_i32_0 = arith.constant 0 : i32
    %c0_i32_1 = arith.constant 0 : i32
    return %arg0, %c0_i32, %c0_i32_0 : i32, i32, i32
  }
  func.func @transform_2(%arg0: i32) -> (i32, i32, i32) {
    %c0_i32 = arith.constant 0 : i32
    %c0_i32_0 = arith.constant 0 : i32
    %c0_i32_1 = arith.constant 0 : i32
    return %arg0, %c0_i32, %c0_i32_0 : i32, i32, i32
  }
}

</mosaic_0001>

<llo_original>
// kernel: tpu_custom_call.1
$region0: #{tpu_custom_call.1}
  #allocation0 [shape = 'u32[]', space=smem, size = 0x4, offset = 0x4, fixed_abs, tag = 'smem constant byte address 0x4 - core index']
  #allocation1 [shape = 'u32[144,128]{1,0:T(1,128)}', space=vmem, size = 0x12000, scoped, tag = 'internal scratch']
  %s0 = inlined_call_operand.vmem [shape: f32[40,9], index: 0, kind: input, shape index: {}]
  %s1 = inlined_call_operand.hbm [shape: f32[2,40,264], index: 1, kind: input, shape index: {}]
  %s2 = inlined_call_operand.hbm [shape: f32[2,40,256], index: 2, kind: output, shape index: {}]
  %s3 = sld [smem:[#allocation0]]
  $region45: #{tpu_custom_call.1} parent=0
    _
  %s5 = ssub.s32 1, %s3
  %s6 = scalar_select 0, %s5, %s3
  $region1: #{tpu_custom_call.1} parent=0
    #allocation2 [shape = 'u8[122880]{0}', space=vmem, size = 0x1e000, scoped, tag = 'input window, operand 1']
    #allocation3 [shape = 's32[2]{0}', space=sflag, size = 0x8, scoped, tag = 'scoped memory for tpu_custom_call.1']
    #allocation4 [shape = 's32[2]{0}', space=sflag, size = 0x8, scoped, tag = 'scoped memory for tpu_custom_call.1']
    #allocation5 [shape = 'u8[81920]{0}', space=vmem, size = 0x14000, scoped, tag = 'output window, operand 0']
    %7 = vsyncpa [#allocation3], 0
    %s8 = scalar_lea.sflag [#allocation3], 1
    %9 = vsyncpa %s8, 0
    %10 = vsyncpa [#allocation4], 0
    %s11 = scalar_lea.sflag [#allocation4], 1
    %12 = vsyncpa %s11, 0
    loop: start=0, step=1, limit=4
    $region2: #{tpu_custom_call.1} parent=1 // loop_pre_header
      _
    $region3: #{tpu_custom_call.1} parent=1 // loop_header
      %s14 = sphi 0, %s18
      %p15 = scmp.ge.s32.totalorder %s14, 4
      %s22 = sphi 0, %s22
      %s24 = sphi 0, %s22
      %s25 = sphi 0, %s24
      %s39 = sphi 0, %s25
      %s45 = sphi 0, %s47
      %s48 = sphi 0, %s45
      %s49 = sphi 0, %s48
      %s65 = sphi 0, %s49
      %s71 = sphi 0, %s73
      %s74 = sphi 0, %s71
      %s75 = sphi 0, %s74
      %s91 = sphi 0, %s75
    $region4: #{tpu_custom_call.1} parent=1 // loop_header_branch
      %17 = sbr.rel (%p15) target = $region8
    $region5: #{tpu_custom_call.1} parent=1 // loop_body
      %s19 = ssub.s32 %s14, 1
      %s20 = ssub.s32 %s14, 2
      %s21 = sadd.s32 %s14, 1
      %s23 = sadd.s32 %s22, 1
      %p26 = scmp.eq.s32.totalorder %s14, 1
      %p27 = scmp.ne.s32.totalorder %s22, %s24
      %p28 = scmp.eq.s32.totalorder %s14, 0
      %p29 = por %p27, %p28
      %p30 = scmp.ne.s32.totalorder %s22, %s24
      %p31 = scmp.eq.s32.totalorder %s19, 1
      %p32 = por %p30, %p31
      %p33 = scmp.ne.s32.totalorder %s24, %s25
      %p34 = scmp.eq.s32.totalorder %s19, 0
      %p35 = por %p33, %p34
      %p36 = scmp.ne.s32.totalorder %s24, %s25
      %p37 = scmp.eq.s32.totalorder %s20, 1
      %p38 = por %p36, %p37
      %p40 = scmp.ne.s32.totalorder %s25, %s39
      %p41 = scmp.eq.s32.totalorder %s20, 0
      %p42 = por %p40, %p41
      %s43 = ssub.s32 %s14, %s21
      %p44 = scmp.eq.s32.totalorder %s43, 0
      %s46 = sadd.s32 %s45, 1
      %s47 = scalar_select %p44, %s45, %s46
      %p50 = pneg %p44
      %p51 = scmp.eq.s32.totalorder %s14, 1
      %p52 = por %p50, %p51
      %p53 = scmp.ne.s32.totalorder %s45, %s48
      %p54 = scmp.eq.s32.totalorder %s14, 0
      %p55 = por %p53, %p54
      %p56 = scmp.ne.s32.totalorder %s45, %s48
      %p57 = scmp.eq.s32.totalorder %s19, 1
      %p58 = por %p56, %p57
      %p59 = scmp.ne.s32.totalorder %s48, %s49
      %p60 = scmp.eq.s32.totalorder %s19, 0
      %p61 = por %p59, %p60
      %p62 = scmp.ne.s32.totalorder %s48, %s49
      %p63 = scmp.eq.s32.totalorder %s20, 1
      %p64 = por %p62, %p63
      %p66 = scmp.ne.s32.totalorder %s49, %s65
      %p67 = scmp.eq.s32.totalorder %s20, 0
      %p68 = por %p66, %p67
      %s69 = ssub.s32 %s14, %s21
      %p70 = scmp.eq.s32.totalorder %s69, 0
      %s72 = sadd.s32 %s71, 1
      %s73 = scalar_select %p70, %s71, %s72
      %p76 = pneg %p70
      %p77 = scmp.eq.s32.totalorder %s14, 1
      %p78 = por %p76, %p77
      %p79 = scmp.ne.s32.totalorder %s71, %s74
      %p80 = scmp.eq.s32.totalorder %s14, 0
      %p81 = por %p79, %p80
      %p82 = scmp.ne.s32.totalorder %s71, %s74
      %p83 = scmp.eq.s32.totalorder %s19, 1
      %p84 = por %p82, %p83
      %p85 = scmp.ne.s32.totalorder %s74, %s75
      %p86 = scmp.eq.s32.totalorder %s19, 0
      %p87 = por %p85, %p86
      %p88 = scmp.ne.s32.totalorder %s74, %s75
      %p89 = scmp.eq.s32.totalorder %s20, 1
      %p90 = por %p88, %p89
      %p92 = scmp.ne.s32.totalorder %s75, %s91
      %p93 = scmp.eq.s32.totalorder %s20, 0
      %p94 = por %p92, %p93
      %p95 = scmp.le.s32.totalorder 1, %s14
      %p96 = scmp.lt.s32.totalorder %s14, 3
      %p97 = pnand %p95, %p96
      %p98 = pneg %p97
      // Predicated region
      $region9: #{tpu_custom_call.1} parent=5 // pred_check
        _
      $region10: #{tpu_custom_call.1} parent=5 // pred_check_branch
        %100 = sbr.rel (%p97) target = $region12
      $region11: #{tpu_custom_call.1} parent=5 // pred_region
        %s101 = ssub.s32 %s14, 1
        // Predicated region
        $region13: #{tpu_custom_call.1} parent=11 // pred_check
          %p102 = pneg %p35
        $region14: #{tpu_custom_call.1} parent=11 // pred_check_branch
          %104 = sbr.rel (%p102) target = $region16
        $region15: #{tpu_custom_call.1} parent=11 // pred_region
          _
        $region16: #{tpu_custom_call.1} parent=11 // pred_fallthru
          _
      $region12: #{tpu_custom_call.1} parent=5 // pred_fallthru
        _
      %p105 = scmp.lt.s32.totalorder %s14, 2
      // Predicated region
      $region17: #{tpu_custom_call.1} parent=5 // pred_check
        %p106 = pneg %p105
      $region18: #{tpu_custom_call.1} parent=5 // pred_check_branch
        %108 = sbr.rel (%p106) target = $region20
      $region19: #{tpu_custom_call.1} parent=5 // pred_region
        // Predicated region
        $region21: #{tpu_custom_call.1} parent=19 // pred_check
          %p109 = pneg %p55
        $region22: #{tpu_custom_call.1} parent=19 // pred_check_branch
          %111 = sbr.rel (%p109) target = $region24
        $region23: #{tpu_custom_call.1} parent=19 // pred_region
          %s112 = sand.u32 %s45, 1
          %s113 = scalar_lea.sflag [#allocation3], %s112
          %s114 = sand.u32 %s45, 1
          %s115 = smul.addr %s114, 120
          %s116 = scalar_lea.vmem [#allocation2], %s115
          %s118 = ssub.s32 1920, 1920
          %119 = vsyncadd %s113, %s118
          %s120 = smul.addr %s14, 15
          %s121 = smul.addr %s120, 128
          %s122 = scalar_lea.hbm %s1, %s121
          %s123 = sshll.u32 %s116, 4
          %s124 = int_to_ptr.vmem [resolvable:$true] %s123
          %129 = dma.hbm_to_vmem [thread:$0]  %s122, 1920, %s124, %s113, 384, 384, 24
        $region24: #{tpu_custom_call.1} parent=19 // pred_fallthru
          _
      $region20: #{tpu_custom_call.1} parent=5 // pred_fallthru
        _
      %p130 = scmp.le.s32.totalorder 1, %s14
      %p131 = scmp.lt.s32.totalorder %s14, 3
      %p132 = pnand %p130, %p131
      %p133 = pneg %p132
      // Predicated region
      $region25: #{tpu_custom_call.1} parent=5 // pred_check
        _
      $region26: #{tpu_custom_call.1} parent=5 // pred_check_branch
        %135 = sbr.rel (%p132) target = $region28
      $region27: #{tpu_custom_call.1} parent=5 // pred_region
        %s136 = ssub.s32 %s14, 1
        %s137 = sand.u32 %s48, 1
        %s138 = scalar_lea.sflag [#allocation3], %s137
        %s139 = sand.u32 %s48, 1
        %s140 = smul.addr %s139, 120
        %s141 = scalar_lea.vmem [#allocation2], %s140
        // Predicated region
        $region29: #{tpu_custom_call.1} parent=27 // pred_check
          %p142 = pneg %p61
        $region30: #{tpu_custom_call.1} parent=27 // pred_check_branch
          %144 = sbr.rel (%p142) target = $region32
        $region31: #{tpu_custom_call.1} parent=27 // pred_region
          %145 = dma.done %s138, 1920
        $region32: #{tpu_custom_call.1} parent=27 // pred_fallthru
          _
        %p146 = pneg %p35
        %p147 = pneg %p32
        %s148 = sand.u32 %s48, 1
        %s149 = scalar_lea.sflag [#allocation3], %s148
        %s150 = sand.u32 %s48, 1
        %s151 = smul.addr %s150, 120
        %s152 = scalar_lea.vmem [#allocation2], %s151
        %p153 = pneg %p61
        %p154 = pneg %p58
        %p155 = pneg %p87
        %p156 = pneg %p84
        %s157 = sand.u32 %s74, 1
        %s158 = scalar_lea.sflag [#allocation4], %s157
        %s159 = sand.u32 %s74, 1
        %s160 = smul.addr %s159, 80
        %s161 = scalar_lea.vmem [#allocation5], %s160
        %v162 = vld [vmem:[%s141] sm:$0xff]
        %v163 = vld [vmem:[%s141 + $0x8] sm:$0xff]
        %v164 = vld [vmem:[%s141 + $0x10] sm:$0xff]
        %v165 = vld [vmem:[%s141 + $0x18] sm:$0xff]
        %v166 = vld [vmem:[%s141 + $0x20] sm:$0xff]
        %v167 = vld [vmem:[%s141 + $0x28] sm:$0xff]
        %v168 = vld [vmem:[%s141 + $0x30] sm:$0xff]
        %v169 = vld [vmem:[%s141 + $0x38] sm:$0xff]
        %v170 = vld [vmem:[%s141 + $0x40] sm:$0xff]
        %v171 = vld [vmem:[%s141 + $0x48] sm:$0xff]
        %v172 = vld [vmem:[%s141 + $0x50] sm:$0xff]
        %v173 = vld [vmem:[%s141 + $0x58] sm:$0xff]
        %v174 = vld [vmem:[%s141 + $0x60] sm:$0xff]
        %v175 = vld [vmem:[%s141 + $0x68] sm:$0xff]
        %v176 = vld [vmem:[%s141 + $0x70] sm:$0xff]
        %v177 = vld [vmem:[%s0] sm:$0xff]
        %v178 = vld [vmem:[%s0 + $0x8] sm:$0xff]
        %v179 = vld [vmem:[%s0 + $0x10] sm:$0xff]
        %v180 = vld [vmem:[%s0 + $0x18] sm:$0xff]
        %v181 = vld [vmem:[%s0 + $0x20] sm:$0xff]
        %183 = vset.pattern.permute.xlu0 0
        %184 = vperm.xlu0 %183, %v177
        %v185 = vpop.permute.xlu0 %184
        %188 = vset.pattern.permute.xlu0 0
        %189 = vperm.xlu0 %188, %v178
        %v190 = vpop.permute.xlu0 %189
        %193 = vset.pattern.permute.xlu0 0
        %194 = vperm.xlu0 %193, %v179
        %v195 = vpop.permute.xlu0 %194
        %198 = vset.pattern.permute.xlu0 0
        %199 = vperm.xlu0 %198, %v180
        %v200 = vpop.permute.xlu0 %199
        %203 = vset.pattern.permute.xlu0 0
        %204 = vperm.xlu0 %203, %v181
        %v205 = vpop.permute.xlu0 %204
        %v207 = vmul.f32 %v185, %v162
        %v208 = vmul.f32 %v185, %v163
        %v209 = vmul.f32 %v190, %v165
        %v210 = vmul.f32 %v190, %v166
        %v211 = vmul.f32 %v195, %v168
        %v212 = vmul.f32 %v195, %v169
        %v213 = vmul.f32 %v200, %v171
        %v214 = vmul.f32 %v200, %v172
        %v215 = vmul.f32 %v205, %v174
        %v216 = vmul.f32 %v205, %v175
        %217 = vset.pattern.permute.xlu0 1
        %218 = vperm.xlu0 %217, %v177
        %v219 = vpop.permute.xlu0 %218
        %221 = vset.pattern.permute.xlu0 1
        %222 = vperm.xlu0 %221, %v178
        %v223 = vpop.permute.xlu0 %222
        %225 = vset.pattern.permute.xlu0 1
        %226 = vperm.xlu0 %225, %v179
        %v227 = vpop.permute.xlu0 %226
        %229 = vset.pattern.permute.xlu0 1
        %230 = vperm.xlu0 %229, %v180
        %v231 = vpop.permute.xlu0 %230
        %233 = vset.pattern.permute.xlu0 1
        %234 = vperm.xlu0 %233, %v181
        %v235 = vpop.permute.xlu0 %234
        %v237 = vmul.f32 %v219, %v162
        %v238 = vmul.f32 %v219, %v163
        %v239 = vmul.f32 %v219, %v164
        %v240 = vmul.f32 %v223, %v165
        %v241 = vmul.f32 %v223, %v166
        %v242 = vmul.f32 %v223, %v167
        %v243 = vmul.f32 %v227, %v168
        %v244 = vmul.f32 %v227, %v169
        %v245 = vmul.f32 %v227, %v170
        %v246 = vmul.f32 %v231, %v171
        %v247 = vmul.f32 %v231, %v172
        %v248 = vmul.f32 %v231, %v173
        %v249 = vmul.f32 %v235, %v174
        %v250 = vmul.f32 %v235, %v175
        %v251 = vmul.f32 %v235, %v176
        %267 = vrot.lane.b32.xlu0 %v237, 127
        %v268 = vpop.permute.xlu0 %267
        %269 = vrot.lane.b32.xlu0 %v238, 127
        %v270 = vpop.permute.xlu0 %269
        %271 = vrot.lane.b32.xlu0 %v239, 127
        %v272 = vpop.permute.xlu0 %271
        %273 = vrot.lane.b32.xlu0 %v240, 127
        %v274 = vpop.permute.xlu0 %273
        %275 = vrot.lane.b32.xlu0 %v241, 127
        %v276 = vpop.permute.xlu0 %275
        %277 = vrot.lane.b32.xlu0 %v242, 127
        %v278 = vpop.permute.xlu0 %277
        %279 = vrot.lane.b32.xlu0 %v243, 127
        %v280 = vpop.permute.xlu0 %279
        %281 = vrot.lane.b32.xlu0 %v244, 127
        %v282 = vpop.permute.xlu0 %281
        %283 = vrot.lane.b32.xlu0 %v245, 127
        %v284 = vpop.permute.xlu0 %283
        %285 = vrot.lane.b32.xlu0 %v246, 127
        %v286 = vpop.permute.xlu0 %285
        %287 = vrot.lane.b32.xlu0 %v247, 127
        %v288 = vpop.permute.xlu0 %287
        %289 = vrot.lane.b32.xlu0 %v248, 127
        %v290 = vpop.permute.xlu0 %289
        %291 = vrot.lane.b32.xlu0 %v249, 127
        %v292 = vpop.permute.xlu0 %291
        %293 = vrot.lane.b32.xlu0 %v250, 127
        %v294 = vpop.permute.xlu0 %293
        %295 = vrot.lane.b32.xlu0 %v251, 127
        %v296 = vpop.permute.xlu0 %295
        %vm297 = vcmask 1039360
        %v298 = vsel %vm297, %v268, %v270
        %v299 = vsel %vm297, %v270, %v272
        %v300 = vsel %vm297, %v274, %v276
        %v301 = vsel %vm297, %v276, %v278
        %v302 = vsel %vm297, %v280, %v282
        %v303 = vsel %vm297, %v282, %v284
        %v304 = vsel %vm297, %v286, %v288
        %v305 = vsel %vm297, %v288, %v290
        %v306 = vsel %vm297, %v292, %v294
        %v307 = vsel %vm297, %v294, %v296
        %v318 = vadd.f32 %v207, %v298
        %v319 = vadd.f32 %v208, %v299
        %v320 = vadd.f32 %v209, %v300
        %v321 = vadd.f32 %v210, %v301
        %v322 = vadd.f32 %v211, %v302
        %v323 = vadd.f32 %v212, %v303
        %v324 = vadd.f32 %v213, %v304
        %v325 = vadd.f32 %v214, %v305
        %v326 = vadd.f32 %v215, %v306
        %v327 = vadd.f32 %v216, %v307
        %328 = vset.pattern.permute.xlu0 2
        %329 = vperm.xlu0 %328, %v177
        %v330 = vpop.permute.xlu0 %329
        %332 = vset.pattern.permute.xlu0 2
        %333 = vperm.xlu0 %332, %v178
        %v334 = vpop.permute.xlu0 %333
        %336 = vset.pattern.permute.xlu0 2
        %337 = vperm.xlu0 %336, %v179
        %v338 = vpop.permute.xlu0 %337
        %340 = vset.pattern.permute.xlu0 2
        %341 = vperm.xlu0 %340, %v180
        %v342 = vpop.permute.xlu0 %341
        %344 = vset.pattern.permute.xlu0 2
        %345 = vperm.xlu0 %344, %v181
        %v346 = vpop.permute.xlu0 %345
        %v348 = vmul.f32 %v330, %v162
        %v349 = vmul.f32 %v330, %v163
        %v350 = vmul.f32 %v330, %v164
        %v351 = vmul.f32 %v334, %v165
        %v352 = vmul.f32 %v334, %v166
        %v353 = vmul.f32 %v334, %v167
        %v354 = vmul.f32 %v338, %v168
        %v355 = vmul.f32 %v338, %v169
        %v356 = vmul.f32 %v338, %v170
        %v357 = vmul.f32 %v342, %v171
        %v358 = vmul.f32 %v342, %v172
        %v359 = vmul.f32 %v342, %v173
        %v360 = vmul.f32 %v346, %v174
        %v361 = vmul.f32 %v346, %v175
        %v362 = vmul.f32 %v346, %v176
        %378 = vrot.lane.b32.xlu0 %v348, 126
        %v379 = vpop.permute.xlu0 %378
        %380 = vrot.lane.b32.xlu0 %v349, 126
        %v381 = vpop.permute.xlu0 %380
        %382 = vrot.lane.b32.xlu0 %v350, 126
        %v383 = vpop.permute.xlu0 %382
        %384 = vrot.lane.b32.xlu0 %v351, 126
        %v385 = vpop.permute.xlu0 %384
        %386 = vrot.lane.b32.xlu0 %v352, 126
        %v387 = vpop.permute.xlu0 %386
        %388 = vrot.lane.b32.xlu0 %v353, 126
        %v389 = vpop.permute.xlu0 %388
        %390 = vrot.lane.b32.xlu0 %v354, 126
        %v391 = vpop.permute.xlu0 %390
        %392 = vrot.lane.b32.xlu0 %v355, 126
        %v393 = vpop.permute.xlu0 %392
        %394 = vrot.lane.b32.xlu0 %v356, 126
        %v395 = vpop.permute.xlu0 %394
        %396 = vrot.lane.b32.xlu0 %v357, 126
        %v397 = vpop.permute.xlu0 %396
        %398 = vrot.lane.b32.xlu0 %v358, 126
        %v399 = vpop.permute.xlu0 %398
        %400 = vrot.lane.b32.xlu0 %v359, 126
        %v401 = vpop.permute.xlu0 %400
        %402 = vrot.lane.b32.xlu0 %v360, 126
        %v403 = vpop.permute.xlu0 %402
        %404 = vrot.lane.b32.xlu0 %v361, 126
        %v405 = vpop.permute.xlu0 %404
        %406 = vrot.lane.b32.xlu0 %v362, 126
        %v407 = vpop.permute.xlu0 %406
        %vm408 = vcmask 1031168
        %v409 = vsel %vm408, %v379, %v381
        %v410 = vsel %vm408, %v381, %v383
        %v411 = vsel %vm408, %v385, %v387
        %v412 = vsel %vm408, %v387, %v389
        %v413 = vsel %vm408, %v391, %v393
        %v414 = vsel %vm408, %v393, %v395
        %v415 = vsel %vm408, %v397, %v399
        %v416 = vsel %vm408, %v399, %v401
        %v417 = vsel %vm408, %v403, %v405
        %v418 = vsel %vm408, %v405, %v407
        %v429 = vadd.f32 %v318, %v409
        %v430 = vadd.f32 %v319, %v410
        %v431 = vadd.f32 %v320, %v411
        %v432 = vadd.f32 %v321, %v412
        %v433 = vadd.f32 %v322, %v413
        %v434 = vadd.f32 %v323, %v414
        %v435 = vadd.f32 %v324, %v415
        %v436 = vadd.f32 %v325, %v416
        %v437 = vadd.f32 %v326, %v417
        %v438 = vadd.f32 %v327, %v418
        %439 = vset.pattern.permute.xlu0 3
        %440 = vperm.xlu0 %439, %v177
        %v441 = vpop.permute.xlu0 %440
        %443 = vset.pattern.permute.xlu0 3
        %444 = vperm.xlu0 %443, %v178
        %v445 = vpop.permute.xlu0 %444
        %447 = vset.pattern.permute.xlu0 3
        %448 = vperm.xlu0 %447, %v179
        %v449 = vpop.permute.xlu0 %448
        %451 = vset.pattern.permute.xlu0 3
        %452 = vperm.xlu0 %451, %v180
        %v453 = vpop.permute.xlu0 %452
        %455 = vset.pattern.permute.xlu0 3
        %456 = vperm.xlu0 %455, %v181
        %v457 = vpop.permute.xlu0 %456
        %v459 = vmul.f32 %v441, %v162
        %v460 = vmul.f32 %v441, %v163
        %v461 = vmul.f32 %v441, %v164
        %v462 = vmul.f32 %v445, %v165
        %v463 = vmul.f32 %v445, %v166
        %v464 = vmul.f32 %v445, %v167
        %v465 = vmul.f32 %v449, %v168
        %v466 = vmul.f32 %v449, %v169
        %v467 = vmul.f32 %v449, %v170
        %v468 = vmul.f32 %v453, %v171
        %v469 = vmul.f32 %v453, %v172
        %v470 = vmul.f32 %v453, %v173
        %v471 = vmul.f32 %v457, %v174
        %v472 = vmul.f32 %v457, %v175
        %v473 = vmul.f32 %v457, %v176
        %489 = vrot.lane.b32.xlu0 %v459, 125
        %v490 = vpop.permute.xlu0 %489
        %491 = vrot.lane.b32.xlu0 %v460, 125
        %v492 = vpop.permute.xlu0 %491
        %493 = vrot.lane.b32.xlu0 %v461, 125
        %v494 = vpop.permute.xlu0 %493
        %495 = vrot.lane.b32.xlu0 %v462, 125
        %v496 = vpop.permute.xlu0 %495
        %497 = vrot.lane.b32.xlu0 %v463, 125
        %v498 = vpop.permute.xlu0 %497
        %499 = vrot.lane.b32.xlu0 %v464, 125
        %v500 = vpop.permute.xlu0 %499
        %501 = vrot.lane.b32.xlu0 %v465, 125
        %v502 = vpop.permute.xlu0 %501
        %503 = vrot.lane.b32.xlu0 %v466, 125
        %v504 = vpop.permute.xlu0 %503
        %505 = vrot.lane.b32.xlu0 %v467, 125
        %v506 = vpop.permute.xlu0 %505
        %507 = vrot.lane.b32.xlu0 %v468, 125
        %v508 = vpop.permute.xlu0 %507
        %509 = vrot.lane.b32.xlu0 %v469, 125
        %v510 = vpop.permute.xlu0 %509
        %511 = vrot.lane.b32.xlu0 %v470, 125
        %v512 = vpop.permute.xlu0 %511
        %513 = vrot.lane.b32.xlu0 %v471, 125
        %v514 = vpop.permute.xlu0 %513
        %515 = vrot.lane.b32.xlu0 %v472, 125
        %v516 = vpop.permute.xlu0 %515
        %517 = vrot.lane.b32.xlu0 %v473, 125
        %v518 = vpop.permute.xlu0 %517
        %vm519 = vcmask 1022976
        %v520 = vsel %vm519, %v490, %v492
        %v521 = vsel %vm519, %v492, %v494
        %v522 = vsel %vm519, %v496, %v498
        %v523 = vsel %vm519, %v498, %v500
        %v524 = vsel %vm519, %v502, %v504
        %v525 = vsel %vm519, %v504, %v506
        %v526 = vsel %vm519, %v508, %v510
        %v527 = vsel %vm519, %v510, %v512
        %v528 = vsel %vm519, %v514, %v516
        %v529 = vsel %vm519, %v516, %v518
        %v540 = vadd.f32 %v429, %v520
        %v541 = vadd.f32 %v430, %v521
        %v542 = vadd.f32 %v431, %v522
        %v543 = vadd.f32 %v432, %v523
        %v544 = vadd.f32 %v433, %v524
        %v545 = vadd.f32 %v434, %v525
        %v546 = vadd.f32 %v435, %v526
        %v547 = vadd.f32 %v436, %v527
        %v548 = vadd.f32 %v437, %v528
        %v549 = vadd.f32 %v438, %v529
        %550 = vset.pattern.permute.xlu0 4
        %551 = vperm.xlu0 %550, %v177
        %v552 = vpop.permute.xlu0 %551
        %554 = vset.pattern.permute.xlu0 4
        %555 = vperm.xlu0 %554, %v178
        %v556 = vpop.permute.xlu0 %555
        %558 = vset.pattern.permute.xlu0 4
        %559 = vperm.xlu0 %558, %v179
        %v560 = vpop.permute.xlu0 %559
        %562 = vset.pattern.permute.xlu0 4
        %563 = vperm.xlu0 %562, %v180
        %v564 = vpop.permute.xlu0 %563
        %566 = vset.pattern.permute.xlu0 4
        %567 = vperm.xlu0 %566, %v181
        %v568 = vpop.permute.xlu0 %567
        %v570 = vmul.f32 %v552, %v162
        %v571 = vmul.f32 %v552, %v163
        %v572 = vmul.f32 %v552, %v164
        %v573 = vmul.f32 %v556, %v165
        %v574 = vmul.f32 %v556, %v166
        %v575 = vmul.f32 %v556, %v167
        %v576 = vmul.f32 %v560, %v168
        %v577 = vmul.f32 %v560, %v169
        %v578 = vmul.f32 %v560, %v170
        %v579 = vmul.f32 %v564, %v171
        %v580 = vmul.f32 %v564, %v172
        %v581 = vmul.f32 %v564, %v173
        %v582 = vmul.f32 %v568, %v174
        %v583 = vmul.f32 %v568, %v175
        %v584 = vmul.f32 %v568, %v176
        %600 = vrot.lane.b32.xlu0 %v570, 124
        %v601 = vpop.permute.xlu0 %600
        %602 = vrot.lane.b32.xlu0 %v571, 124
        %v603 = vpop.permute.xlu0 %602
        %604 = vrot.lane.b32.xlu0 %v572, 124
        %v605 = vpop.permute.xlu0 %604
        %606 = vrot.lane.b32.xlu0 %v573, 124
        %v607 = vpop.permute.xlu0 %606
        %608 = vrot.lane.b32.xlu0 %v574, 124
        %v609 = vpop.permute.xlu0 %608
        %610 = vrot.lane.b32.xlu0 %v575, 124
        %v611 = vpop.permute.xlu0 %610
        %612 = vrot.lane.b32.xlu0 %v576, 124
        %v613 = vpop.permute.xlu0 %612
        %614 = vrot.lane.b32.xlu0 %v577, 124
        %v615 = vpop.permute.xlu0 %614
        %616 = vrot.lane.b32.xlu0 %v578, 124
        %v617 = vpop.permute.xlu0 %616
        %618 = vrot.lane.b32.xlu0 %v579, 124
        %v619 = vpop.permute.xlu0 %618
        %620 = vrot.lane.b32.xlu0 %v580, 124
        %v621 = vpop.permute.xlu0 %620
        %622 = vrot.lane.b32.xlu0 %v581, 124
        %v623 = vpop.permute.xlu0 %622
        %624 = vrot.lane.b32.xlu0 %v582, 124
        %v625 = vpop.permute.xlu0 %624
        %626 = vrot.lane.b32.xlu0 %v583, 124
        %v627 = vpop.permute.xlu0 %626
        %628 = vrot.lane.b32.xlu0 %v584, 124
        %v629 = vpop.permute.xlu0 %628
        %vm630 = vcmask 1014784
        %v631 = vsel %vm630, %v601, %v603
        %v632 = vsel %vm630, %v603, %v605
        %v633 = vsel %vm630, %v607, %v609
        %v634 = vsel %vm630, %v609, %v611
        %v635 = vsel %vm630, %v613, %v615
        %v636 = vsel %vm630, %v615, %v617
        %v637 = vsel %vm630, %v619, %v621
        %v638 = vsel %vm630, %v621, %v623
        %v639 = vsel %vm630, %v625, %v627
        %v640 = vsel %vm630, %v627, %v629
        %v651 = vadd.f32 %v540, %v631
        %v652 = vadd.f32 %v541, %v632
        %v653 = vadd.f32 %v542, %v633
        %v654 = vadd.f32 %v543, %v634
        %v655 = vadd.f32 %v544, %v635
        %v656 = vadd.f32 %v545, %v636
        %v657 = vadd.f32 %v546, %v637
        %v658 = vadd.f32 %v547, %v638
        %v659 = vadd.f32 %v548, %v639
        %v660 = vadd.f32 %v549, %v640
        %661 = vset.pattern.permute.xlu0 5
        %662 = vperm.xlu0 %661, %v177
        %v663 = vpop.permute.xlu0 %662
        %665 = vset.pattern.permute.xlu0 5
        %666 = vperm.xlu0 %665, %v178
        %v667 = vpop.permute.xlu0 %666
        %669 = vset.pattern.permute.xlu0 5
        %670 = vperm.xlu0 %669, %v179
        %v671 = vpop.permute.xlu0 %670
        %673 = vset.pattern.permute.xlu0 5
        %674 = vperm.xlu0 %673, %v180
        %v675 = vpop.permute.xlu0 %674
        %677 = vset.pattern.permute.xlu0 5
        %678 = vperm.xlu0 %677, %v181
        %v679 = vpop.permute.xlu0 %678
        %v681 = vmul.f32 %v663, %v162
        %v682 = vmul.f32 %v663, %v163
        %v683 = vmul.f32 %v663, %v164
        %v684 = vmul.f32 %v667, %v165
        %v685 = vmul.f32 %v667, %v166
        %v686 = vmul.f32 %v667, %v167
        %v687 = vmul.f32 %v671, %v168
        %v688 = vmul.f32 %v671, %v169
        %v689 = vmul.f32 %v671, %v170
        %v690 = vmul.f32 %v675, %v171
        %v691 = vmul.f32 %v675, %v172
        %v692 = vmul.f32 %v675, %v173
        %v693 = vmul.f32 %v679, %v174
        %v694 = vmul.f32 %v679, %v175
        %v695 = vmul.f32 %v679, %v176
        %711 = vrot.lane.b32.xlu0 %v681, 123
        %v712 = vpop.permute.xlu0 %711
        %713 = vrot.lane.b32.xlu0 %v682, 123
        %v714 = vpop.permute.xlu0 %713
        %715 = vrot.lane.b32.xlu0 %v683, 123
        %v716 = vpop.permute.xlu0 %715
        %717 = vrot.lane.b32.xlu0 %v684, 123
        %v718 = vpop.permute.xlu0 %717
        %719 = vrot.lane.b32.xlu0 %v685, 123
        %v720 = vpop.permute.xlu0 %719
        %721 = vrot.lane.b32.xlu0 %v686, 123
        %v722 = vpop.permute.xlu0 %721
        %723 = vrot.lane.b32.xlu0 %v687, 123
        %v724 = vpop.permute.xlu0 %723
        %725 = vrot.lane.b32.xlu0 %v688, 123
        %v726 = vpop.permute.xlu0 %725
        %727 = vrot.lane.b32.xlu0 %v689, 123
        %v728 = vpop.permute.xlu0 %727
        %729 = vrot.lane.b32.xlu0 %v690, 123
        %v730 = vpop.permute.xlu0 %729
        %731 = vrot.lane.b32.xlu0 %v691, 123
        %v732 = vpop.permute.xlu0 %731
        %733 = vrot.lane.b32.xlu0 %v692, 123
        %v734 = vpop.permute.xlu0 %733
        %735 = vrot.lane.b32.xlu0 %v693, 123
        %v736 = vpop.permute.xlu0 %735
        %737 = vrot.lane.b32.xlu0 %v694, 123
        %v738 = vpop.permute.xlu0 %737
        %739 = vrot.lane.b32.xlu0 %v695, 123
        %v740 = vpop.permute.xlu0 %739
        %vm741 = vcmask 1006592
        %v742 = vsel %vm741, %v712, %v714
        %v743 = vsel %vm741, %v714, %v716
        %v744 = vsel %vm741, %v718, %v720
        %v745 = vsel %vm741, %v720, %v722
        %v746 = vsel %vm741, %v724, %v726
        %v747 = vsel %vm741, %v726, %v728
        %v748 = vsel %vm741, %v730, %v732
        %v749 = vsel %vm741, %v732, %v734
        %v750 = vsel %vm741, %v736, %v738
        %v751 = vsel %vm741, %v738, %v740
        %v762 = vadd.f32 %v651, %v742
        %v763 = vadd.f32 %v652, %v743
        %v764 = vadd.f32 %v653, %v744
        %v765 = vadd.f32 %v654, %v745
        %v766 = vadd.f32 %v655, %v746
        %v767 = vadd.f32 %v656, %v747
        %v768 = vadd.f32 %v657, %v748
        %v769 = vadd.f32 %v658, %v749
        %v770 = vadd.f32 %v659, %v750
        %v771 = vadd.f32 %v660, %v751
        %772 = vset.pattern.permute.xlu0 6
        %773 = vperm.xlu0 %772, %v177
        %v774 = vpop.permute.xlu0 %773
        %776 = vset.pattern.permute.xlu0 6
        %777 = vperm.xlu0 %776, %v178
        %v778 = vpop.permute.xlu0 %777
        %780 = vset.pattern.permute.xlu0 6
        %781 = vperm.xlu0 %780, %v179
        %v782 = vpop.permute.xlu0 %781
        %784 = vset.pattern.permute.xlu0 6
        %785 = vperm.xlu0 %784, %v180
        %v786 = vpop.permute.xlu0 %785
        %788 = vset.pattern.permute.xlu0 6
        %789 = vperm.xlu0 %788, %v181
        %v790 = vpop.permute.xlu0 %789
        %v792 = vmul.f32 %v774, %v162
        %v793 = vmul.f32 %v774, %v163
        %v794 = vmul.f32 %v774, %v164
        %v795 = vmul.f32 %v778, %v165
        %v796 = vmul.f32 %v778, %v166
        %v797 = vmul.f32 %v778, %v167
        %v798 = vmul.f32 %v782, %v168
        %v799 = vmul.f32 %v782, %v169
        %v800 = vmul.f32 %v782, %v170
        %v801 = vmul.f32 %v786, %v171
        %v802 = vmul.f32 %v786, %v172
        %v803 = vmul.f32 %v786, %v173
        %v804 = vmul.f32 %v790, %v174
        %v805 = vmul.f32 %v790, %v175
        %v806 = vmul.f32 %v790, %v176
        %822 = vrot.lane.b32.xlu0 %v792, 122
        %v823 = vpop.permute.xlu0 %822
        %824 = vrot.lane.b32.xlu0 %v793, 122
        %v825 = vpop.permute.xlu0 %824
        %826 = vrot.lane.b32.xlu0 %v794, 122
        %v827 = vpop.permute.xlu0 %826
        %828 = vrot.lane.b32.xlu0 %v795, 122
        %v829 = vpop.permute.xlu0 %828
        %830 = vrot.lane.b32.xlu0 %v796, 122
        %v831 = vpop.permute.xlu0 %830
        %832 = vrot.lane.b32.xlu0 %v797, 122
        %v833 = vpop.permute.xlu0 %832
        %834 = vrot.lane.b32.xlu0 %v798, 122
        %v835 = vpop.permute.xlu0 %834
        %836 = vrot.lane.b32.xlu0 %v799, 122
        %v837 = vpop.permute.xlu0 %836
        %838 = vrot.lane.b32.xlu0 %v800, 122
        %v839 = vpop.permute.xlu0 %838
        %840 = vrot.lane.b32.xlu0 %v801, 122
        %v841 = vpop.permute.xlu0 %840
        %842 = vrot.lane.b32.xlu0 %v802, 122
        %v843 = vpop.permute.xlu0 %842
        %844 = vrot.lane.b32.xlu0 %v803, 122
        %v845 = vpop.permute.xlu0 %844
        %846 = vrot.lane.b32.xlu0 %v804, 122
        %v847 = vpop.permute.xlu0 %846
        %848 = vrot.lane.b32.xlu0 %v805, 122
        %v849 = vpop.permute.xlu0 %848
        %850 = vrot.lane.b32.xlu0 %v806, 122
        %v851 = vpop.permute.xlu0 %850
        %vm852 = vcmask 998400
        %v853 = vsel %vm852, %v823, %v825
        %v854 = vsel %vm852, %v825, %v827
        %v855 = vsel %vm852, %v829, %v831
        %v856 = vsel %vm852, %v831, %v833
        %v857 = vsel %vm852, %v835, %v837
        %v858 = vsel %vm852, %v837, %v839
        %v859 = vsel %vm852, %v841, %v843
        %v860 = vsel %vm852, %v843, %v845
        %v861 = vsel %vm852, %v847, %v849
        %v862 = vsel %vm852, %v849, %v851
        %v873 = vadd.f32 %v762, %v853
        %v874 = vadd.f32 %v763, %v854
        %v875 = vadd.f32 %v764, %v855
        %v876 = vadd.f32 %v765, %v856
        %v877 = vadd.f32 %v766, %v857
        %v878 = vadd.f32 %v767, %v858
        %v879 = vadd.f32 %v768, %v859
        %v880 = vadd.f32 %v769, %v860
        %v881 = vadd.f32 %v770, %v861
        %v882 = vadd.f32 %v771, %v862
        %883 = vset.pattern.permute.xlu0 7
        %884 = vperm.xlu0 %883, %v177
        %v885 = vpop.permute.xlu0 %884
        %887 = vset.pattern.permute.xlu0 7
        %888 = vperm.xlu0 %887, %v178
        %v889 = vpop.permute.xlu0 %888
        %891 = vset.pattern.permute.xlu0 7
        %892 = vperm.xlu0 %891, %v179
        %v893 = vpop.permute.xlu0 %892
        %895 = vset.pattern.permute.xlu0 7
        %896 = vperm.xlu0 %895, %v180
        %v897 = vpop.permute.xlu0 %896
        %899 = vset.pattern.permute.xlu0 7
        %900 = vperm.xlu0 %899, %v181
        %v901 = vpop.permute.xlu0 %900
        %v903 = vmul.f32 %v885, %v162
        %v904 = vmul.f32 %v885, %v163
        %v905 = vmul.f32 %v885, %v164
        %v906 = vmul.f32 %v889, %v165
        %v907 = vmul.f32 %v889, %v166
        %v908 = vmul.f32 %v889, %v167
        %v909 = vmul.f32 %v893, %v168
        %v910 = vmul.f32 %v893, %v169
        %v911 = vmul.f32 %v893, %v170
        %v912 = vmul.f32 %v897, %v171
        %v913 = vmul.f32 %v897, %v172
        %v914 = vmul.f32 %v897, %v173
        %v915 = vmul.f32 %v901, %v174
        %v916 = vmul.f32 %v901, %v175
        %v917 = vmul.f32 %v901, %v176
        %933 = vrot.lane.b32.xlu0 %v903, 121
        %v934 = vpop.permute.xlu0 %933
        %935 = vrot.lane.b32.xlu0 %v904, 121
        %v936 = vpop.permute.xlu0 %935
        %937 = vrot.lane.b32.xlu0 %v905, 121
        %v938 = vpop.permute.xlu0 %937
        %939 = vrot.lane.b32.xlu0 %v906, 121
        %v940 = vpop.permute.xlu0 %939
        %941 = vrot.lane.b32.xlu0 %v907, 121
        %v942 = vpop.permute.xlu0 %941
        %943 = vrot.lane.b32.xlu0 %v908, 121
        %v944 = vpop.permute.xlu0 %943
        %945 = vrot.lane.b32.xlu0 %v909, 121
        %v946 = vpop.permute.xlu0 %945
        %947 = vrot.lane.b32.xlu0 %v910, 121
        %v948 = vpop.permute.xlu0 %947
        %949 = vrot.lane.b32.xlu0 %v911, 121
        %v950 = vpop.permute.xlu0 %949
        %951 = vrot.lane.b32.xlu0 %v912, 121
        %v952 = vpop.permute.xlu0 %951
        %953 = vrot.lane.b32.xlu0 %v913, 121
        %v954 = vpop.permute.xlu0 %953
        %955 = vrot.lane.b32.xlu0 %v914, 121
        %v956 = vpop.permute.xlu0 %955
        %957 = vrot.lane.b32.xlu0 %v915, 121
        %v958 = vpop.permute.xlu0 %957
        %959 = vrot.lane.b32.xlu0 %v916, 121
        %v960 = vpop.permute.xlu0 %959
        %961 = vrot.lane.b32.xlu0 %v917, 121
        %v962 = vpop.permute.xlu0 %961
        %vm963 = vcmask 990208
        %v964 = vsel %vm963, %v934, %v936
        %v965 = vsel %vm963, %v936, %v938
        %v966 = vsel %vm963, %v940, %v942
        %v967 = vsel %vm963, %v942, %v944
        %v968 = vsel %vm963, %v946, %v948
        %v969 = vsel %vm963, %v948, %v950
        %v970 = vsel %vm963, %v952, %v954
        %v971 = vsel %vm963, %v954, %v956
        %v972 = vsel %vm963, %v958, %v960
        %v973 = vsel %vm963, %v960, %v962
        %v984 = vadd.f32 %v873, %v964
        %v985 = vadd.f32 %v874, %v965
        %v986 = vadd.f32 %v875, %v966
        %v987 = vadd.f32 %v876, %v967
        %v988 = vadd.f32 %v877, %v968
        %v989 = vadd.f32 %v878, %v969
        %v990 = vadd.f32 %v879, %v970
        %v991 = vadd.f32 %v880, %v971
        %v992 = vadd.f32 %v881, %v972
        %v993 = vadd.f32 %v882, %v973
        %994 = vset.pattern.permute.xlu0 8
        %995 = vperm.xlu0 %994, %v177
        %v996 = vpop.permute.xlu0 %995
        %998 = vset.pattern.permute.xlu0 8
        %999 = vperm.xlu0 %998, %v178
        %v1000 = vpop.permute.xlu0 %999
        %1002 = vset.pattern.permute.xlu0 8
        %1003 = vperm.xlu0 %1002, %v179
        %v1004 = vpop.permute.xlu0 %1003
        %1006 = vset.pattern.permute.xlu0 8
        %1007 = vperm.xlu0 %1006, %v180
        %v1008 = vpop.permute.xlu0 %1007
        %1010 = vset.pattern.permute.xlu0 8
        %1011 = vperm.xlu0 %1010, %v181
        %v1012 = vpop.permute.xlu0 %1011
        %v1014 = vmul.f32 %v996, %v162
        %v1015 = vmul.f32 %v996, %v163
        %v1016 = vmul.f32 %v996, %v164
        %v1017 = vmul.f32 %v1000, %v165
        %v1018 = vmul.f32 %v1000, %v166
        %v1019 = vmul.f32 %v1000, %v167
        %v1020 = vmul.f32 %v1004, %v168
        %v1021 = vmul.f32 %v1004, %v169
        %v1022 = vmul.f32 %v1004, %v170
        %v1023 = vmul.f32 %v1008, %v171
        %v1024 = vmul.f32 %v1008, %v172
        %v1025 = vmul.f32 %v1008, %v173
        %v1026 = vmul.f32 %v1012, %v174
        %v1027 = vmul.f32 %v1012, %v175
        %v1028 = vmul.f32 %v1012, %v176
        %1044 = vrot.lane.b32.xlu0 %v1014, 120
        %v1045 = vpop.permute.xlu0 %1044
        %1046 = vrot.lane.b32.xlu0 %v1015, 120
        %v1047 = vpop.permute.xlu0 %1046
        %1048 = vrot.lane.b32.xlu0 %v1016, 120
        %v1049 = vpop.permute.xlu0 %1048
        %1050 = vrot.lane.b32.xlu0 %v1017, 120
        %v1051 = vpop.permute.xlu0 %1050
        %1052 = vrot.lane.b32.xlu0 %v1018, 120
        %v1053 = vpop.permute.xlu0 %1052
        %1054 = vrot.lane.b32.xlu0 %v1019, 120
        %v1055 = vpop.permute.xlu0 %1054
        %1056 = vrot.lane.b32.xlu0 %v1020, 120
        %v1057 = vpop.permute.xlu0 %1056
        %1058 = vrot.lane.b32.xlu0 %v1021, 120
        %v1059 = vpop.permute.xlu0 %1058
        %1060 = vrot.lane.b32.xlu0 %v1022, 120
        %v1061 = vpop.permute.xlu0 %1060
        %1062 = vrot.lane.b32.xlu0 %v1023, 120
        %v1063 = vpop.permute.xlu0 %1062
        %1064 = vrot.lane.b32.xlu0 %v1024, 120
        %v1065 = vpop.permute.xlu0 %1064
        %1066 = vrot.lane.b32.xlu0 %v1025, 120
        %v1067 = vpop.permute.xlu0 %1066
        %1068 = vrot.lane.b32.xlu0 %v1026, 120
        %v1069 = vpop.permute.xlu0 %1068
        %1070 = vrot.lane.b32.xlu0 %v1027, 120
        %v1071 = vpop.permute.xlu0 %1070
        %1072 = vrot.lane.b32.xlu0 %v1028, 120
        %v1073 = vpop.permute.xlu0 %1072
        %vm1074 = vcmask 982016
        %v1075 = vsel %vm1074, %v1045, %v1047
        %v1076 = vsel %vm1074, %v1047, %v1049
        %v1077 = vsel %vm1074, %v1051, %v1053
        %v1078 = vsel %vm1074, %v1053, %v1055
        %v1079 = vsel %vm1074, %v1057, %v1059
        %v1080 = vsel %vm1074, %v1059, %v1061
        %v1081 = vsel %vm1074, %v1063, %v1065
        %v1082 = vsel %vm1074, %v1065, %v1067
        %v1083 = vsel %vm1074, %v1069, %v1071
        %v1084 = vsel %vm1074, %v1071, %v1073
        %v1095 = vadd.f32 %v984, %v1075
        %v1096 = vadd.f32 %v985, %v1076
        %v1097 = vadd.f32 %v986, %v1077
        %v1098 = vadd.f32 %v987, %v1078
        %v1099 = vadd.f32 %v988, %v1079
        %v1100 = vadd.f32 %v989, %v1080
        %v1101 = vadd.f32 %v990, %v1081
        %v1102 = vadd.f32 %v991, %v1082
        %v1103 = vadd.f32 %v992, %v1083
        %v1104 = vadd.f32 %v993, %v1084
        %1105 = vst [vmem:[%s161] sm:$0xff] %v1095
        %1106 = vst [vmem:[%s161 + $0x8] sm:$0xff] %v1096
        %1107 = vst [vmem:[%s161 + $0x10] sm:$0xff] %v1097
        %1108 = vst [vmem:[%s161 + $0x18] sm:$0xff] %v1098
        %1109 = vst [vmem:[%s161 + $0x20] sm:$0xff] %v1099
        %1110 = vst [vmem:[%s161 + $0x28] sm:$0xff] %v1100
        %1111 = vst [vmem:[%s161 + $0x30] sm:$0xff] %v1101
        %1112 = vst [vmem:[%s161 + $0x38] sm:$0xff] %v1102
        %1113 = vst [vmem:[%s161 + $0x40] sm:$0xff] %v1103
        %1114 = vst [vmem:[%s161 + $0x48] sm:$0xff] %v1104
        %s1115 = sand.u32 %s74, 1
        %s1116 = scalar_lea.sflag [#allocation4], %s1115
        %s1117 = sand.u32 %s74, 1
        %s1118 = smul.addr %s1117, 80
        %s1119 = scalar_lea.vmem [#allocation5], %s1118
        // Predicated region
        $region33: #{tpu_custom_call.1} parent=27 // pred_check
          %p1120 = pneg %p84
        $region34: #{tpu_custom_call.1} parent=27 // pred_check_branch
          %1122 = sbr.rel (%p1120) target = $region36
        $region35: #{tpu_custom_call.1} parent=27 // pred_region
          %s1124 = ssub.s32 1280, 1280
          %1125 = vsyncadd %s1116, %s1124
          %s1126 = smul.addr %s19, 10
          %s1127 = smul.addr %s1126, 128
          %s1128 = scalar_lea.hbm %s2, %s1127
          %s1129 = sshll.u32 %s1119, 4
          %s1130 = int_to_ptr.vmem [resolvable:$true] %s1129
          %1135 = dma.vmem_to_hbm [thread:$0]  %s1130, 1280, %s1128, %s1116, 256, 256, 16
        $region36: #{tpu_custom_call.1} parent=27 // pred_fallthru
          _
      $region28: #{tpu_custom_call.1} parent=5 // pred_fallthru
        _
      %p1136 = scmp.le.s32.totalorder 2, %s14
      // Predicated region
      $region37: #{tpu_custom_call.1} parent=5 // pred_check
        %p1137 = pneg %p1136
      $region38: #{tpu_custom_call.1} parent=5 // pred_check_branch
        %1139 = sbr.rel (%p1137) target = $region40
      $region39: #{tpu_custom_call.1} parent=5 // pred_region
        %s1140 = ssub.s32 %s14, 2
        // Predicated region
        $region41: #{tpu_custom_call.1} parent=39 // pred_check
          %p1141 = pneg %p90
        $region42: #{tpu_custom_call.1} parent=39 // pred_check_branch
          %1143 = sbr.rel (%p1141) target = $region44
        $region43: #{tpu_custom_call.1} parent=39 // pred_region
          %s1144 = sand.u32 %s75, 1
          %s1145 = scalar_lea.sflag [#allocation4], %s1144
          %s1146 = sand.u32 %s75, 1
          %s1147 = smul.addr %s1146, 80
          %s1148 = scalar_lea.vmem [#allocation5], %s1147
          %1149 = dma.done %s1145, 1280
        $region44: #{tpu_custom_call.1} parent=39 // pred_fallthru
          _
      $region40: #{tpu_custom_call.1} parent=5 // pred_fallthru
        _
    $region6: #{tpu_custom_call.1} parent=1 // loop_footer
      %s18 = sadd.s32 1, %s14
    $region7: #{tpu_custom_call.1} parent=1 // loop_footer_branch
      %13 = sbr.rel target = $region3
    $region8: #{tpu_custom_call.1} parent=1 // loop_exit
      _
    %1150 = vsyncpa [#allocation3], 1
    %s1151 = scalar_lea.sflag [#allocation3], 1
    %1152 = vsyncpa %s1151, 1
    %1153 = vsyncpa [#allocation4], 1
    %s1154 = scalar_lea.sflag [#allocation4], 1
    %1155 = vsyncpa %s1154, 1

</llo_original>
